<compile_context>
chip_gen: v5e
topology: v5e:2x2
jax: 0.10.0
libtpu: 0.0.40
codegen_flags: <defaults>
</compile_context>

<pallas_src>
import functools

import jax
import jax.numpy as jnp
from jax.experimental import pallas as pl
from jax.experimental.pallas import tpu as pltpu

LANE = 128
SUBLANE = 8


def _pad_to(n: int, m: int) -> int:
    return ((n + m - 1) // m) * m


# ---- feature probe: single-buffered resident params (halves param VMEM) ----
try:
    pl.BlockSpec((SUBLANE, LANE), lambda i: (0, 0), pipeline_mode=pl.Buffered(1))
    _PARAM_PIPELINE_KW = dict(pipeline_mode=pl.Buffered(1))
    _PARAM_BUF_COUNT = 1
except Exception:  # pragma: no cover - older API without pipeline_mode
    _PARAM_PIPELINE_KW = {}
    _PARAM_BUF_COUNT = 2


def _make_mlp_kernel(nl_hidden: int):
    """Fused MLP kernel: nl_hidden x (Linear + tanh), then final Linear."""

    def kernel(*refs):
        # refs = [x, w0, b0, w1, b1, ..., w_pred, b_pred, out]
        x_ref = refs[0]
        o_ref = refs[-1]
        params = refs[1:-1]

        h = x_ref[...]                                   # f32 (TM, Fp)
        for i in range(nl_hidden):
            w = params[2 * i][...]                       # bf16 or f32
            b = params[2 * i + 1][...]                   # f32 (1, Hp)
            acc = jnp.dot(h.astype(w.dtype), w,
                          preferred_element_type=jnp.float32)
            # bias-add + tanh kept in f32 (portable to v5e, which has no
            # bf16 VPU/EUP).  TODO(synk): on v6e/v7x a bf16 tanh path would
            # double EUP throughput.
            h = jnp.tanh(acc + b)
        w = params[-2][...]
        b = params[-1][...]
        o_ref[...] = jnp.dot(h.astype(w.dtype), w,
                             preferred_element_type=jnp.float32) + b

    return kernel


def pad_params(weights, biases, compute_dtype=jnp.bfloat16):
    """One-time lane-dense padding + cast of the parameters (cold path).

    Zero-padded weight rows/cols + zero bias + tanh(0)=0 keep padded lanes
    exactly zero, so the math is unchanged.
    """
    padded_w, padded_b = [], []
    in_dim = _pad_to(weights[0].shape[0], LANE)
    for w, b in zip(weights, biases):
        fan_in, fan_out = w.shape
        out_dim = _pad_to(fan_out, LANE)
        w_p = jnp.pad(w.astype(jnp.float32),
                      ((0, in_dim - fan_in), (0, out_dim - fan_out)))
        b_p = jnp.pad(jnp.reshape(b, (1, -1)).astype(jnp.float32),
                      ((0, 0), (0, out_dim - fan_out)))
        padded_w.append(w_p.astype(compute_dtype))   # narrow MXU/DMA storage
        padded_b.append(b_p)                          # bias stays f32
        in_dim = out_dim
    return padded_w, padded_b


@functools.partial(jax.jit, static_argnames=("n_output", "block_batch"))
def mlp_forward_padded(x, padded_w, padded_b, *, n_output, block_batch=512):
    """Hot path: only x is padded per call; parameters are pre-padded."""
    nl_hidden = len(padded_w) - 1
    B, F = x.shape
    Fp = padded_w[0].shape[0]
    Op = padded_w[-1].shape[1]

    # ---- batch tiling: one grid step when the whole batch fits -------------
    tm_cap = max(SUBLANE, (int(block_batch) // SUBLANE) * SUBLANE)
    TM = min(_pad_to(max(B, SUBLANE), SUBLANE), tm_cap)
    Bp = _pad_to(B, TM)
    grid = (Bp // TM,)

    x_p = x.astype(jnp.float32)
    if Bp != B or Fp != F:
        x_p = jnp.pad(x_p, ((0, Bp - B), (0, Fp - F)))

    # ---- specs --------------------------------------------------------------
    inputs = [x_p]
    in_specs = [pl.BlockSpec((TM, Fp), lambda i: (i, 0))]
    for w_p, b_p in zip(padded_w, padded_b):
        inputs.extend([w_p, b_p])
        # Constant index_map -> VMEM-resident; single-buffered when supported.
        in_specs.append(pl.BlockSpec(w_p.shape, lambda i: (0, 0),
                                     **_PARAM_PIPELINE_KW))
        in_specs.append(pl.BlockSpec(b_p.shape, lambda i: (0, 0),
                                     **_PARAM_PIPELINE_KW))

    out_spec = pl.BlockSpec((TM, Op), lambda i: (i, 0))
    out_shape = jax.ShapeDtypeStruct((Bp, Op), jnp.float32)

    # ---- VMEM budget: real resident footprint + headroom, <= 48 MiB (v7x) --
    param_bytes = sum(int(w.size) * w.dtype.itemsize for w in padded_w) \
        + sum(int(b.size) * 4 for b in padded_b)
    tile_bytes = (TM * Fp + TM * Op) * 4
    resident = 2 * tile_bytes + _PARAM_BUF_COUNT * param_bytes
    vmem_limit = int(min(max(resident + (8 << 20), 16 << 20), 48 << 20))

    # ---- cost estimate (scheduling hint for XLA) ----------------------------
    flops = 0
    transcendentals = 0
    for i, w_p in enumerate(padded_w):
        flops += 2 * Bp * int(w_p.shape[0]) * int(w_p.shape[1])
        if i < nl_hidden:
            transcendentals += Bp * int(w_p.shape[1])
    bytes_accessed = int(x_p.size) * 4 + param_bytes + Bp * Op * 4
    cost = pl.CostEstimate(flops=flops, transcendentals=transcendentals,
                           bytes_accessed=bytes_accessed)

    out = pl.pallas_call(
        _make_mlp_kernel(nl_hidden),
        out_shape=out_shape,
        grid=grid,
        in_specs=in_specs,
        out_specs=out_spec,
        compiler_params=pltpu.CompilerParams(
            dimension_semantics=("parallel",),
            vmem_limit_bytes=vmem_limit,
        ),
        cost_estimate=cost,
    )(*inputs)

    return out[:B, :n_output]


def mlp_forward(x, weights, biases, *, block_batch=512,
                compute_dtype=jnp.bfloat16):
    """Convenience wrapper: pad params (cold) then run the fused kernel (hot).

    Repeated callers should call `pad_params` once and reuse
    `mlp_forward_padded` directly.
    """
    padded_w, padded_b = pad_params(weights, biases, compute_dtype)
    n_output = int(weights[-1].shape[1])
    return mlp_forward_padded(x, padded_w, padded_b, n_output=n_output,
                              block_batch=block_batch)


def init_params(key, n_feature, n_hidden, n_output, nl_hidden):
    """Deterministic parameter init (uniform, PyTorch-Linear-like scale)."""
    if not isinstance(n_hidden, (list, tuple)):
        n_hidden = [int(n_hidden)] * nl_hidden
    sizes_in = [n_feature] + list(n_hidden[:-1])
    sizes_out = list(n_hidden)
    weights, biases = [], []
    for fan_in, fan_out in zip(sizes_in + [n_hidden[-1]],
                               sizes_out + [n_output]):
        key, kw, kb = jax.random.split(key, 3)
        bound = 1.0 / jnp.sqrt(fan_in)
        w = jax.random.uniform(kw, (fan_in, fan_out), jnp.float32,
                               minval=-bound, maxval=bound)
        b = jax.random.uniform(kb, (1, fan_out), jnp.float32,
                               minval=-bound, maxval=bound)
        weights.append(w)
        biases.append(b)
    return weights, biases


def mlp_reference(x, weights, biases):
    h = x
    for w, b in zip(weights[:-1], biases[:-1]):
        h = jnp.tanh(h @ w + b)
    return h @ weights[-1] + biases[-1]


if __name__ == "__main__":
    # Net(n_feature=32, n_hidden=32, n_output=8, NL_HIDDEN=2), default
    # batch_normalization=False, ACTIVATION=tanh.
    B, n_feature, n_hidden, n_output, NL_HIDDEN = 64, 32, 32, 8, 2

    key = jax.random.PRNGKey(0)
    key, kx = jax.random.split(key)
    x = jax.random.normal(kx, (B, n_feature), jnp.float32)

    weights, biases = init_params(key, n_feature, n_hidden, n_output,
                                  NL_HIDDEN)
    ref = mlp_reference(x, weights, biases)

    # Exact f32 path: single grid step (B=64 fits one tile), strict check.
    out_f32 = mlp_forward(x, weights, biases, compute_dtype=jnp.float32)
    out_f32 = jax.block_until_ready(out_f32)
    assert out_f32.shape == (B, n_output)
    assert jnp.allclose(out_f32, ref, atol=1e-5, rtol=1e-5), \
        "f32 kernel mismatch vs reference"

    # Default bf16-MXU path (weights/dot inputs bf16, f32 accumulate &
    # elementwise): looser check; second call exercises the jitted hot path
    # with pre-padded params.
    padded_w, padded_b = pad_params(weights, biases, jnp.bfloat16)
    out_bf16 = mlp_forward_padded(x, padded_w, padded_b, n_output=n_output)
    out_bf16 = mlp_forward_padded(x, padded_w, padded_b, n_output=n_output)
    out_bf16 = jax.block_until_ready(out_bf16)
    assert out_bf16.shape == (B, n_output)
    assert jnp.allclose(out_bf16, ref, atol=2e-2, rtol=2e-2), \
        "bf16 kernel mismatch vs reference"

    print("KERNEL_OK")
</pallas_src>

<mosaic_0001>
module attributes {stable_mosaic.version = 11 : i64} {
  func.func @kernel(%arg0: i32, %arg1: memref<64x128xf32, #tpu.memory_space<vmem>>, %arg2: memref<128x128xf32, #tpu.memory_space<vmem>>, %arg3: memref<1x128xf32, #tpu.memory_space<vmem>>, %arg4: memref<128x128xf32, #tpu.memory_space<vmem>>, %arg5: memref<1x128xf32, #tpu.memory_space<vmem>>, %arg6: memref<128x128xf32, #tpu.memory_space<vmem>>, %arg7: memref<1x128xf32, #tpu.memory_space<vmem>>, %arg8: memref<64x128xf32, #tpu.memory_space<vmem>>) attributes {dimension_semantics = [#tpu.dimension_semantics<parallel>], iteration_bounds = array<i64: 1>, scalar_prefetch = 0 : i64, scratch_operands = 0 : i64, tpu.core_type = #tpu.core_type<tc>, window_params = [{transform_indices = @transform_0, window_bounds = array<i64: 64, 128>}, {pipeline_mode = #tpu.pipeline_mode<synchronous>, transform_indices = @transform_1, window_bounds = array<i64: 128, 128>}, {pipeline_mode = #tpu.pipeline_mode<synchronous>, transform_indices = @transform_2, window_bounds = array<i64: 1, 128>}, {pipeline_mode = #tpu.pipeline_mode<synchronous>, transform_indices = @transform_3, window_bounds = array<i64: 128, 128>}, {pipeline_mode = #tpu.pipeline_mode<synchronous>, transform_indices = @transform_4, window_bounds = array<i64: 1, 128>}, {pipeline_mode = #tpu.pipeline_mode<synchronous>, transform_indices = @transform_5, window_bounds = array<i64: 128, 128>}, {pipeline_mode = #tpu.pipeline_mode<synchronous>, transform_indices = @transform_6, window_bounds = array<i64: 1, 128>}, {transform_indices = @transform_7, window_bounds = array<i64: 64, 128>}]} {
    %c0 = arith.constant 0 : index
    %c0_0 = arith.constant 0 : index
    %0 = vector.load %arg1[%c0, %c0_0] : memref<64x128xf32, #tpu.memory_space<vmem>>, vector<64x128xf32>
    %c0_1 = arith.constant 0 : index
    %c0_2 = arith.constant 0 : index
    %1 = vector.load %arg2[%c0_1, %c0_2] : memref<128x128xf32, #tpu.memory_space<vmem>>, vector<128x128xf32>
    %c0_3 = arith.constant 0 : index
    %c0_4 = arith.constant 0 : index
    %2 = vector.load %arg3[%c0_3, %c0_4] : memref<1x128xf32, #tpu.memory_space<vmem>>, vector<1x128xf32>
    %cst = arith.constant dense<0.000000e+00> : vector<64x128xf32>
    %3 = tpu.matmul %0, %1, %cst {dimension_numbers = #tpu.dot_dimension_numbers<[1], [0], [0], [1], [0, 0, 1, 1], [], []>} : vector<64x128xf32>, vector<128x128xf32>, vector<64x128xf32> -> vector<64x128xf32>
    %4 = vector.broadcast %2 : vector<1x128xf32> to vector<64x128xf32>
    %5 = arith.addf %3, %4 : vector<64x128xf32>
    %6 = math.tanh %5 : vector<64x128xf32>
    %c0_5 = arith.constant 0 : index
    %c0_6 = arith.constant 0 : index
    %7 = vector.load %arg4[%c0_5, %c0_6] : memref<128x128xf32, #tpu.memory_space<vmem>>, vector<128x128xf32>
    %c0_7 = arith.constant 0 : index
    %c0_8 = arith.constant 0 : index
    %8 = vector.load %arg5[%c0_7, %c0_8] : memref<1x128xf32, #tpu.memory_space<vmem>>, vector<1x128xf32>
    %cst_9 = arith.constant dense<0.000000e+00> : vector<64x128xf32>
    %9 = tpu.matmul %6, %7, %cst_9 {dimension_numbers = #tpu.dot_dimension_numbers<[1], [0], [0], [1], [0, 0, 1, 1], [], []>} : vector<64x128xf32>, vector<128x128xf32>, vector<64x128xf32> -> vector<64x128xf32>
    %10 = vector.broadcast %8 : vector<1x128xf32> to vector<64x128xf32>
    %11 = arith.addf %9, %10 : vector<64x128xf32>
    %12 = math.tanh %11 : vector<64x128xf32>
    %c0_10 = arith.constant 0 : index
    %c0_11 = arith.constant 0 : index
    %13 = vector.load %arg6[%c0_10, %c0_11] : memref<128x128xf32, #tpu.memory_space<vmem>>, vector<128x128xf32>
    %c0_12 = arith.constant 0 : index
    %c0_13 = arith.constant 0 : index
    %14 = vector.load %arg7[%c0_12, %c0_13] : memref<1x128xf32, #tpu.memory_space<vmem>>, vector<1x128xf32>
    %cst_14 = arith.constant dense<0.000000e+00> : vector<64x128xf32>
    %15 = tpu.matmul %12, %13, %cst_14 {dimension_numbers = #tpu.dot_dimension_numbers<[1], [0], [0], [1], [0, 0, 1, 1], [], []>} : vector<64x128xf32>, vector<128x128xf32>, vector<64x128xf32> -> vector<64x128xf32>
    %16 = vector.broadcast %14 : vector<1x128xf32> to vector<64x128xf32>
    %17 = arith.addf %15, %16 : vector<64x128xf32>
    %c0_15 = arith.constant 0 : index
    %c0_16 = arith.constant 0 : index
    %18 = vector.load %arg8[%c0_15, %c0_16] : memref<64x128xf32, #tpu.memory_space<vmem>>, vector<64x128xf32>
    tpu.vector_store %arg8[%c0_15, %c0_16], %17 {strides = array<i32>} : memref<64x128xf32, #tpu.memory_space<vmem>>, vector<64x128xf32>,
    return
  }
  func.func @transform_0(%arg0: i32) -> (i32, i32) {
    %c0_i32 = arith.constant 0 : i32
    %c0_i32_0 = arith.constant 0 : i32
    return %arg0, %c0_i32 : i32, i32
  }
  func.func @transform_1(%arg0: i32) -> (i32, i32) {
    %c0_i32 = arith.constant 0 : i32
    %c0_i32_0 = arith.constant 0 : i32
    %c0_i32_1 = arith.constant 0 : i32
    return %c0_i32, %c0_i32_0 : i32, i32
  }
  func.func @transform_2(%arg0: i32) -> (i32, i32) {
    %c0_i32 = arith.constant 0 : i32
    %c0_i32_0 = arith.constant 0 : i32
    %c0_i32_1 = arith.constant 0 : i32
    return %c0_i32, %c0_i32_0 : i32, i32
  }
  func.func @transform_3(%arg0: i32) -> (i32, i32) {
    %c0_i32 = arith.constant 0 : i32
    %c0_i32_0 = arith.constant 0 : i32
    %c0_i32_1 = arith.constant 0 : i32
    return %c0_i32, %c0_i32_0 : i32, i32
  }
  func.func @transform_4(%arg0: i32) -> (i32, i32) {
    %c0_i32 = arith.constant 0 : i32
    %c0_i32_0 = arith.constant 0 : i32
    %c0_i32_1 = arith.constant 0 : i32
    return %c0_i32, %c0_i32_0 : i32, i32
  }
  func.func @transform_5(%arg0: i32) -> (i32, i32) {
    %c0_i32 = arith.constant 0 : i32
    %c0_i32_0 = arith.constant 0 : i32
    %c0_i32_1 = arith.constant 0 : i32
    return %c0_i32, %c0_i32_0 : i32, i32
  }
  func.func @transform_6(%arg0: i32) -> (i32, i32) {
    %c0_i32 = arith.constant 0 : i32
    %c0_i32_0 = arith.constant 0 : i32
    %c0_i32_1 = arith.constant 0 : i32
    return %c0_i32, %c0_i32_0 : i32, i32
  }
  func.func @transform_7(%arg0: i32) -> (i32, i32) {
    %c0_i32 = arith.constant 0 : i32
    %c0_i32_0 = arith.constant 0 : i32
    return %arg0, %c0_i32 : i32, i32
  }
}

</mosaic_0001>

<llo_original>
// kernel: mlp_forward_padded.1
$region0: #{mlp_forward_padded.1}
  #allocation0 [shape = 'u32[]', space=smem, size = 0x4, offset = 0x4, fixed_abs, tag = 'smem constant byte address 0x4 - core index']
  #allocation1 [shape = 'u32[72,128]{1,0:T(1,128)}', space=vmem, size = 0x9000, scoped, tag = 'internal scratch']
  %s0 = inlined_call_operand.vmem [shape: f32[64,128], index: 0, kind: input, shape index: {}]
  %s1 = inlined_call_operand.vmem [shape: f32[128,128], index: 1, kind: input, shape index: {}]
  %s2 = inlined_call_operand.vmem [shape: f32[1,128], index: 2, kind: input, shape index: {}]
  %s3 = inlined_call_operand.hbm [shape: f32[128,128], index: 3, kind: input, shape index: {}]
  %s4 = inlined_call_operand.vmem [shape: f32[1,128], index: 4, kind: input, shape index: {}]
  %s5 = inlined_call_operand.hbm [shape: f32[128,128], index: 5, kind: input, shape index: {}]
  %s6 = inlined_call_operand.vmem [shape: f32[1,128], index: 6, kind: input, shape index: {}]
  %s7 = inlined_call_operand.vmem [shape: f32[64,128], index: 7, kind: output, shape index: {}]
  %s8 = sld [smem:[#allocation0]]
  $region46: #{mlp_forward_padded.1} parent=0
    _
  %s10 = ssub.s32 1, %s8
  %s11 = scalar_select 0, %s10, %s8
  $region1: #{mlp_forward_padded.1} parent=0
    #allocation2 [shape = 'u8[65536]{0}', space=vmem, size = 0x10000, scoped, tag = 'input window, operand 3, single buffered']
    #allocation3 [shape = 's32[1]{0}', space=sflag, size = 0x4, scoped, tag = 'scoped memory for mlp_forward_padded.1']
    #allocation4 [shape = 'u8[65536]{0}', space=vmem, size = 0x10000, scoped, tag = 'input window, operand 5, single buffered']
    #allocation5 [shape = 's32[1]{0}', space=sflag, size = 0x4, scoped, tag = 'scoped memory for mlp_forward_padded.1']
    %12 = vsyncpa [#allocation3], 0
    %13 = vsyncpa [#allocation5], 0
    // Predicated region
    $region2: #{mlp_forward_padded.1} parent=1 // pred_check
      _
    $region3: #{mlp_forward_padded.1} parent=1 // pred_check_branch
      %15 = sbr.rel (0) target = $region5
    $region4: #{mlp_forward_padded.1} parent=1 // pred_region
      _
    $region5: #{mlp_forward_padded.1} parent=1 // pred_fallthru
      _
    // Predicated region
    $region6: #{mlp_forward_padded.1} parent=1 // pred_check
      _
    $region7: #{mlp_forward_padded.1} parent=1 // pred_check_branch
      %17 = sbr.rel (0) target = $region9
    $region8: #{mlp_forward_padded.1} parent=1 // pred_region
      _
    $region9: #{mlp_forward_padded.1} parent=1 // pred_fallthru
      _
    // Predicated region
    $region10: #{mlp_forward_padded.1} parent=1 // pred_check
      _
    $region11: #{mlp_forward_padded.1} parent=1 // pred_check_branch
      %19 = sbr.rel (0) target = $region13
    $region12: #{mlp_forward_padded.1} parent=1 // pred_region
      _
    $region13: #{mlp_forward_padded.1} parent=1 // pred_fallthru
      _
    // Predicated region
    $region14: #{mlp_forward_padded.1} parent=1 // pred_check
      _
    $region15: #{mlp_forward_padded.1} parent=1 // pred_check_branch
      %21 = sbr.rel (0) target = $region17
    $region16: #{mlp_forward_padded.1} parent=1 // pred_region
      %23 = vsyncadd [#allocation3], 0
      %s24 = sshll.u32 %s3, 4
      %s25 = int_to_ptr.hbm [resolvable:$true] %s24
      %s26 = sshll.u32 [#allocation2], 4
      %s27 = int_to_ptr.vmem [resolvable:$true] %s26
      %32 = dma.hbm_to_vmem [thread:$0]  %s25, 2048, %s27, [#allocation3], 128, 128, 8
    $region17: #{mlp_forward_padded.1} parent=1 // pred_fallthru
      _
    // Predicated region
    $region18: #{mlp_forward_padded.1} parent=1 // pred_check
      _
    $region19: #{mlp_forward_padded.1} parent=1 // pred_check_branch
      %34 = sbr.rel (0) target = $region21
    $region20: #{mlp_forward_padded.1} parent=1 // pred_region
      _
    $region21: #{mlp_forward_padded.1} parent=1 // pred_fallthru
      _
    // Predicated region
    $region22: #{mlp_forward_padded.1} parent=1 // pred_check
      _
    $region23: #{mlp_forward_padded.1} parent=1 // pred_check_branch
      %36 = sbr.rel (0) target = $region25
    $region24: #{mlp_forward_padded.1} parent=1 // pred_region
      %38 = vsyncadd [#allocation5], 0
      %s39 = sshll.u32 %s5, 4
      %s40 = int_to_ptr.hbm [resolvable:$true] %s39
      %s41 = sshll.u32 [#allocation4], 4
      %s42 = int_to_ptr.vmem [resolvable:$true] %s41
      %47 = dma.hbm_to_vmem [thread:$0]  %s40, 2048, %s42, [#allocation5], 128, 128, 8
    $region25: #{mlp_forward_padded.1} parent=1 // pred_fallthru
      _
    // Predicated region
    $region26: #{mlp_forward_padded.1} parent=1 // pred_check
      _
    $region27: #{mlp_forward_padded.1} parent=1 // pred_check_branch
      %49 = sbr.rel (0) target = $region29
    $region28: #{mlp_forward_padded.1} parent=1 // pred_region
      _
    $region29: #{mlp_forward_padded.1} parent=1 // pred_fallthru
      _
    // Predicated region
    $region30: #{mlp_forward_padded.1} parent=1 // pred_check
      _
    $region31: #{mlp_forward_padded.1} parent=1 // pred_check_branch
      %51 = sbr.rel (0) target = $region33
    $region32: #{mlp_forward_padded.1} parent=1 // pred_region
      %53 = dma.done [#allocation3], 2048
    $region33: #{mlp_forward_padded.1} parent=1 // pred_fallthru
      _
    // Predicated region
    $region34: #{mlp_forward_padded.1} parent=1 // pred_check
      _
    $region35: #{mlp_forward_padded.1} parent=1 // pred_check_branch
      %55 = sbr.rel (0) target = $region37
    $region36: #{mlp_forward_padded.1} parent=1 // pred_region
      %57 = dma.done [#allocation5], 2048
    $region37: #{mlp_forward_padded.1} parent=1 // pred_fallthru
      _
    %v58 = vld [vmem:[%s0] sm:$0xff]
    %v59 = vld [vmem:[%s0 + $0x8] sm:$0xff]
    %v60 = vld [vmem:[%s0 + $0x10] sm:$0xff]
    %v61 = vld [vmem:[%s0 + $0x18] sm:$0xff]
    %v62 = vld [vmem:[%s0 + $0x20] sm:$0xff]
    %v63 = vld [vmem:[%s0 + $0x28] sm:$0xff]
    %v64 = vld [vmem:[%s0 + $0x30] sm:$0xff]
    %v65 = vld [vmem:[%s0 + $0x38] sm:$0xff]
    %v66 = vld [vmem:[%s1] sm:$0xff]
    %v67 = vld [vmem:[%s1 + $0x8] sm:$0xff]
    %v68 = vld [vmem:[%s1 + $0x10] sm:$0xff]
    %v69 = vld [vmem:[%s1 + $0x18] sm:$0xff]
    %v70 = vld [vmem:[%s1 + $0x20] sm:$0xff]
    %v71 = vld [vmem:[%s1 + $0x28] sm:$0xff]
    %v72 = vld [vmem:[%s1 + $0x30] sm:$0xff]
    %v73 = vld [vmem:[%s1 + $0x38] sm:$0xff]
    %v74 = vld [vmem:[%s1 + $0x40] sm:$0xff]
    %v75 = vld [vmem:[%s1 + $0x48] sm:$0xff]
    %v76 = vld [vmem:[%s1 + $0x50] sm:$0xff]
    %v77 = vld [vmem:[%s1 + $0x58] sm:$0xff]
    %v78 = vld [vmem:[%s1 + $0x60] sm:$0xff]
    %v79 = vld [vmem:[%s1 + $0x68] sm:$0xff]
    %v80 = vld [vmem:[%s1 + $0x70] sm:$0xff]
    %v81 = vld [vmem:[%s1 + $0x78] sm:$0xff]
    %v82 = vld [vmem:[%s2] sm:$0x1]
    %v84 = vperm.slane %v82, 0
    %86 = vmatpush.msra.mxu0 %v81
    %87 = vmatpush.msra.mxu0 %v80
    %88 = vmatpush.msra.mxu0 %v79
    %89 = vmatpush.msra.mxu0 %v78
    %90 = vmatpush.msra.mxu0 %v77
    %91 = vmatpush.msra.mxu0 %v76
    %92 = vmatpush.msra.mxu0 %v75
    %93 = vmatpush.msra.mxu0 %v74
    %94 = vmatpush.msra.mxu0 %v73
    %95 = vmatpush.msra.mxu0 %v72
    %96 = vmatpush.msra.mxu0 %v71
    %97 = vmatpush.msra.mxu0 %v70
    %98 = vmatpush.msra.mxu0 %v69
    %99 = vmatpush.msra.mxu0 %v68
    %100 = vmatpush.msra.mxu0 %v67
    %101 = vmatpush.msra.mxu0 %v66
    %102 = vmatmul.f32.gmra.mxu0 %v58
    %v103 = vpop.f32.mrf.mxu0
    %v104 = vadd.f32 %v84, %v103
    %105 = vmatmul.f32.gmra.mxu0 %v59
    %v106 = vpop.f32.mrf.mxu0
    %v107 = vadd.f32 %v84, %v106
    %108 = vmatmul.f32.gmra.mxu0 %v60
    %v109 = vpop.f32.mrf.mxu0
    %v110 = vadd.f32 %v84, %v109
    %111 = vmatmul.f32.gmra.mxu0 %v61
    %v112 = vpop.f32.mrf.mxu0
    %v113 = vadd.f32 %v84, %v112
    %114 = vmatmul.f32.gmra.mxu0 %v62
    %v115 = vpop.f32.mrf.mxu0
    %v116 = vadd.f32 %v84, %v115
    %117 = vmatmul.f32.gmra.mxu0 %v63
    %v118 = vpop.f32.mrf.mxu0
    %v119 = vadd.f32 %v84, %v118
    %120 = vmatmul.f32.gmra.mxu0 %v64
    %v121 = vpop.f32.mrf.mxu0
    %v122 = vadd.f32 %v84, %v121
    %123 = vmatmul.f32.gmra.mxu0 %v65
    %v124 = vpop.f32.mrf.mxu0
    %v125 = vadd.f32 %v84, %v124
    %126 = vdwg.mxu0
    %v127 = vtanh.pop %v104
    %v128 = vtanh.pop %v107
    %v129 = vtanh.pop %v110
    %v130 = vtanh.pop %v113
    %v131 = vtanh.pop %v116
    %v132 = vtanh.pop %v119
    %v133 = vtanh.pop %v122
    %v134 = vtanh.pop %v125
    %v135 = vld [vmem:[#allocation2] sm:$0xff]
    %v136 = vld [vmem:[#allocation2 + $0x8] sm:$0xff]
    %v137 = vld [vmem:[#allocation2 + $0x10] sm:$0xff]
    %v138 = vld [vmem:[#allocation2 + $0x18] sm:$0xff]
    %v139 = vld [vmem:[#allocation2 + $0x20] sm:$0xff]
    %v140 = vld [vmem:[#allocation2 + $0x28] sm:$0xff]
    %v141 = vld [vmem:[#allocation2 + $0x30] sm:$0xff]
    %v142 = vld [vmem:[#allocation2 + $0x38] sm:$0xff]
    %v143 = vld [vmem:[#allocation2 + $0x40] sm:$0xff]
    %v144 = vld [vmem:[#allocation2 + $0x48] sm:$0xff]
    %v145 = vld [vmem:[#allocation2 + $0x50] sm:$0xff]
    %v146 = vld [vmem:[#allocation2 + $0x58] sm:$0xff]
    %v147 = vld [vmem:[#allocation2 + $0x60] sm:$0xff]
    %v148 = vld [vmem:[#allocation2 + $0x68] sm:$0xff]
    %v149 = vld [vmem:[#allocation2 + $0x70] sm:$0xff]
    %v150 = vld [vmem:[#allocation2 + $0x78] sm:$0xff]
    %v151 = vld [vmem:[%s4] sm:$0x1]
    %v153 = vperm.slane %v151, 0
    %155 = vmatpush.msra.mxu0 %v150
    %156 = vmatpush.msra.mxu0 %v149
    %157 = vmatpush.msra.mxu0 %v148
    %158 = vmatpush.msra.mxu0 %v147
    %159 = vmatpush.msra.mxu0 %v146
    %160 = vmatpush.msra.mxu0 %v145
    %161 = vmatpush.msra.mxu0 %v144
    %162 = vmatpush.msra.mxu0 %v143
    %163 = vmatpush.msra.mxu0 %v142
    %164 = vmatpush.msra.mxu0 %v141
    %165 = vmatpush.msra.mxu0 %v140
    %166 = vmatpush.msra.mxu0 %v139
    %167 = vmatpush.msra.mxu0 %v138
    %168 = vmatpush.msra.mxu0 %v137
    %169 = vmatpush.msra.mxu0 %v136
    %170 = vmatpush.msra.mxu0 %v135
    %171 = vmatmul.f32.gmra.mxu0 %v127
    %v172 = vpop.f32.mrf.mxu0
    %v173 = vadd.f32 %v153, %v172
    %174 = vmatmul.f32.gmra.mxu0 %v128
    %v175 = vpop.f32.mrf.mxu0
    %v176 = vadd.f32 %v153, %v175
    %177 = vmatmul.f32.gmra.mxu0 %v129
    %v178 = vpop.f32.mrf.mxu0
    %v179 = vadd.f32 %v153, %v178
    %180 = vmatmul.f32.gmra.mxu0 %v130
    %v181 = vpop.f32.mrf.mxu0
    %v182 = vadd.f32 %v153, %v181
    %183 = vmatmul.f32.gmra.mxu0 %v131
    %v184 = vpop.f32.mrf.mxu0
    %v185 = vadd.f32 %v153, %v184
    %186 = vmatmul.f32.gmra.mxu0 %v132
    %v187 = vpop.f32.mrf.mxu0
    %v188 = vadd.f32 %v153, %v187
    %189 = vmatmul.f32.gmra.mxu0 %v133
    %v190 = vpop.f32.mrf.mxu0
    %v191 = vadd.f32 %v153, %v190
    %192 = vmatmul.f32.gmra.mxu0 %v134
    %v193 = vpop.f32.mrf.mxu0
    %v194 = vadd.f32 %v153, %v193
    %195 = vdwg.mxu0
    %v196 = vtanh.pop %v173
    %v197 = vtanh.pop %v176
    %v198 = vtanh.pop %v179
    %v199 = vtanh.pop %v182
    %v200 = vtanh.pop %v185
    %v201 = vtanh.pop %v188
    %v202 = vtanh.pop %v191
    %v203 = vtanh.pop %v194
    %v204 = vld [vmem:[#allocation4] sm:$0xff]
    %v205 = vld [vmem:[#allocation4 + $0x8] sm:$0xff]
    %v206 = vld [vmem:[#allocation4 + $0x10] sm:$0xff]
    %v207 = vld [vmem:[#allocation4 + $0x18] sm:$0xff]
    %v208 = vld [vmem:[#allocation4 + $0x20] sm:$0xff]
    %v209 = vld [vmem:[#allocation4 + $0x28] sm:$0xff]
    %v210 = vld [vmem:[#allocation4 + $0x30] sm:$0xff]
    %v211 = vld [vmem:[#allocation4 + $0x38] sm:$0xff]
    %v212 = vld [vmem:[#allocation4 + $0x40] sm:$0xff]
    %v213 = vld [vmem:[#allocation4 + $0x48] sm:$0xff]
    %v214 = vld [vmem:[#allocation4 + $0x50] sm:$0xff]
    %v215 = vld [vmem:[#allocation4 + $0x58] sm:$0xff]
    %v216 = vld [vmem:[#allocation4 + $0x60] sm:$0xff]
    %v217 = vld [vmem:[#allocation4 + $0x68] sm:$0xff]
    %v218 = vld [vmem:[#allocation4 + $0x70] sm:$0xff]
    %v219 = vld [vmem:[#allocation4 + $0x78] sm:$0xff]
    %v220 = vld [vmem:[%s6] sm:$0x1]
    %v222 = vperm.slane %v220, 0
    %224 = vmatpush.msra.mxu0 %v219
    %225 = vmatpush.msra.mxu0 %v218
    %226 = vmatpush.msra.mxu0 %v217
    %227 = vmatpush.msra.mxu0 %v216
    %228 = vmatpush.msra.mxu0 %v215
    %229 = vmatpush.msra.mxu0 %v214
    %230 = vmatpush.msra.mxu0 %v213
    %231 = vmatpush.msra.mxu0 %v212
    %232 = vmatpush.msra.mxu0 %v211
    %233 = vmatpush.msra.mxu0 %v210
    %234 = vmatpush.msra.mxu0 %v209
    %235 = vmatpush.msra.mxu0 %v208
    %236 = vmatpush.msra.mxu0 %v207
    %237 = vmatpush.msra.mxu0 %v206
    %238 = vmatpush.msra.mxu0 %v205
    %239 = vmatpush.msra.mxu0 %v204
    %240 = vmatmul.f32.gmra.mxu0 %v196
    %v241 = vpop.f32.mrf.mxu0
    %v242 = vadd.f32 %v222, %v241
    %243 = vmatmul.f32.gmra.mxu0 %v197
    %v244 = vpop.f32.mrf.mxu0
    %v245 = vadd.f32 %v222, %v244
    %246 = vmatmul.f32.gmra.mxu0 %v198
    %v247 = vpop.f32.mrf.mxu0
    %v248 = vadd.f32 %v222, %v247
    %249 = vmatmul.f32.gmra.mxu0 %v199
    %v250 = vpop.f32.mrf.mxu0
    %v251 = vadd.f32 %v222, %v250
    %252 = vmatmul.f32.gmra.mxu0 %v200
    %v253 = vpop.f32.mrf.mxu0
    %v254 = vadd.f32 %v222, %v253
    %255 = vmatmul.f32.gmra.mxu0 %v201
    %v256 = vpop.f32.mrf.mxu0
    %v257 = vadd.f32 %v222, %v256
    %258 = vmatmul.f32.gmra.mxu0 %v202
    %v259 = vpop.f32.mrf.mxu0
    %v260 = vadd.f32 %v222, %v259
    %261 = vmatmul.f32.gmra.mxu0 %v203
    %v262 = vpop.f32.mrf.mxu0
    %v263 = vadd.f32 %v222, %v262
    %264 = vdwg.mxu0
    %265 = vst [vmem:[%s7] sm:$0xff] %v242
    %266 = vst [vmem:[%s7 + $0x8] sm:$0xff] %v245
    %267 = vst [vmem:[%s7 + $0x10] sm:$0xff] %v248
    %268 = vst [vmem:[%s7 + $0x18] sm:$0xff] %v251
    %269 = vst [vmem:[%s7 + $0x20] sm:$0xff] %v254
    %270 = vst [vmem:[%s7 + $0x28] sm:$0xff] %v257
    %271 = vst [vmem:[%s7 + $0x30] sm:$0xff] %v260
    %272 = vst [vmem:[%s7 + $0x38] sm:$0xff] %v263
    // Predicated region
    $region38: #{mlp_forward_padded.1} parent=1 // pred_check
      _
    $region39: #{mlp_forward_padded.1} parent=1 // pred_check_branch
      %274 = sbr.rel (0) target = $region41
    $region40: #{mlp_forward_padded.1} parent=1 // pred_region
      _
    $region41: #{mlp_forward_padded.1} parent=1 // pred_fallthru
      _
    // Predicated region
    $region42: #{mlp_forward_padded.1} parent=1 // pred_check
      _
    $region43: #{mlp_forward_padded.1} parent=1 // pred_check_branch
      %276 = sbr.rel (0) target = $region45
    $region44: #{mlp_forward_padded.1} parent=1 // pred_region
      _
    $region45: #{mlp_forward_padded.1} parent=1 // pred_fallthru
      _
    %277 = vsyncpa [#allocation3], 1
    %278 = vsyncpa [#allocation5], 1

</llo_original>
